<compile_context>
chip_gen: v5e
topology: v5e:2x2
jax: 0.10.0
libtpu: 0.0.40
codegen_flags: <defaults>
</compile_context>

<pallas_src>
import jax
import jax.numpy as jnp
from jax.experimental import pallas as pl
from jax.experimental.pallas import tpu as pltpu

_LANE = 128
_MAX_TILE_ROWS = 4096   # up to 2 MiB f32 per mel block per input
_NUM_CORES = 2          # v7x megacore split; harmless sequential pass on v5e/v6e


def _cdiv(a, b):
    return (a + b - 1) // b


def _round_up(x, m):
    return ((x + m - 1) // m) * m


def _mel_rows_view(x, n_valid, rows):
    """Lane-dense (rows, 128) view of a mel tensor without a materializing
    pad/cast pass.  Free reshape when n_valid % 128 == 0; otherwise only the
    <128-element row tail is appended.  Input dtype is preserved."""
    flat = x.reshape(-1)
    pad = rows * _LANE - n_valid
    if pad:
        # TODO(synk): this minimal tail pad still copies when n_mel % 128 != 0;
        # a native (B, T, M) blocking path would avoid it at the cost of lane
        # padding in HBM.
        flat = jnp.pad(flat, (0, pad))
    return flat.reshape(rows, _LANE)


def _pack_pred(x, n_valid, rows, pad_value=0.0):
    """The six tiny [B, T] predictor tensors keep the pad/stack path."""
    flat = x.astype(jnp.float32).reshape(-1)
    flat = jnp.pad(flat, (0, rows * _LANE - n_valid), constant_values=pad_value)
    return flat.reshape(rows, _LANE)


def _make_kernel(mel_rows, tile_rows, tiles_per_core):
    fold = tile_rows % 8 == 0

    def kernel(mel_p_ref, mel_t_ref, pred_ref, tgt_ref, out_ref):
        c = pl.program_id(0)   # core / partial index      ("parallel")
        i = pl.program_id(1)   # mel tile within this core ("arbitrary")

        @pl.when(i == 0)
        def _init():
            out_ref[...] = jnp.zeros_like(out_ref)

        # Duration / pitch / energy sum-of-squares, folded to (8,128) bands
        # (rows 8:16 / 16:24 / 24:32).  Targets are raw; the log(x + 0.5)
        # transform happens here, exactly as in the module.  Computed once
        # (core 0 only); the wrapper reads core 0's bands.
        @pl.when(jnp.logical_and(i == 0, c == 0))
        def _pred_losses():
            for j in range(3):
                p = pred_ref[j].astype(jnp.float32)
                t = jnp.log(tgt_ref[j].astype(jnp.float32) + 0.5)
                dd = (p - t) * (p - t)
                out_ref[0, 8 * (j + 1):8 * (j + 2), :] = (
                    dd.reshape(-1, 8, _LANE).sum(axis=0))

        # ---- mel partial sum-of-squares (pure VPU work, hidden under DMA) ----
        blk = c * tiles_per_core + i              # logical (unclamped) tile id
        row0 = blk * tile_rows
        rows = jax.lax.broadcasted_iota(jnp.int32, (tile_rows, _LANE), 0) + row0
        d = (mel_p_ref[...].astype(jnp.float32)
             - mel_t_ref[...].astype(jnp.float32))
        # Mask the ragged tail of the last block and any clamped duplicate
        # block of the other core; unspecified out-of-bounds data never enters
        # the sum.
        dd = jnp.where(rows < mel_rows, d * d, 0.0)
        if fold:
            out_ref[0, 0:8, :] += dd.reshape(tile_rows // 8, 8, _LANE).sum(axis=0)
        else:   # tiny inputs: the single block is the whole (<8 row) array
            out_ref[0, 0:tile_rows, :] += dd

    return kernel


@jax.jit
def tts_loss(mel_predicted, duration_predicted, pitch_predicted,
             energy_predicted, mel_target, duration, pitch, energy):
    n_mel = int(mel_predicted.size)
    n_pred = int(duration_predicted.size)
    assert n_mel > 0 and n_pred > 0, "empty inputs"
    assert int(mel_target.size) == n_mel

    # ---- mel path: lane-dense row view, no materializing pad/cast pass ----
    mel_rows = _cdiv(n_mel, _LANE)
    if mel_rows >= 8:
        tile_rows = min(_MAX_TILE_ROWS, (mel_rows // 8) * 8)
    else:
        tile_rows = mel_rows                      # one full-array block
    num_blocks = _cdiv(mel_rows, tile_rows)
    tiles_per_core = _cdiv(num_blocks, _NUM_CORES)

    mel_p = _mel_rows_view(mel_predicted, n_mel, mel_rows)
    mel_t = _mel_rows_view(mel_target, n_mel, mel_rows)

    # ---- predictor path: pack 3 preds / 3 raw targets into two arrays ----
    prows = _round_up(_cdiv(n_pred, _LANE), 8)
    preds = jnp.stack([
        _pack_pred(duration_predicted, n_pred, prows),
        _pack_pred(pitch_predicted, n_pred, prows),
        _pack_pred(energy_predicted, n_pred, prows),
    ])
    # Targets padded with 0.5 so log(pad + 0.5) == 0 matches the 0-padded preds.
    tgts = jnp.stack([
        _pack_pred(duration, n_pred, prows, pad_value=0.5),
        _pack_pred(pitch, n_pred, prows, pad_value=0.5),
        _pack_pred(energy, n_pred, prows, pad_value=0.5),
    ])

    last_blk = num_blocks - 1
    mel_spec = pl.BlockSpec(
        (tile_rows, _LANE),
        # Clamp the (possibly out-of-range) duplicate tile of the second core;
        # its contribution is fully masked in the kernel.
        lambda c, i: (jnp.minimum(c * tiles_per_core + i, last_blk), 0))
    # Constant index_map -> resident block; single-buffered to halve footprint.
    pred_spec = pl.BlockSpec((3, prows, _LANE), lambda c, i: (0, 0, 0),
                             pipeline_mode=pl.Buffered(1))
    out_spec = pl.BlockSpec((1, 32, _LANE), lambda c, i: (c, 0, 0))

    kernel = _make_kernel(mel_rows, tile_rows, tiles_per_core)

    # Explicit scoped-VMEM budget: double-buffered mel input blocks, headroom
    # for the in-kernel f32/i32 temporaries of the elementwise+fold chain,
    # resident predictor blocks, output partials, plus slack.  Never below the
    # smallest chip default (16 MiB on v5e).
    itemsize = max(mel_p.dtype.itemsize, mel_t.dtype.itemsize)
    vmem_budget = (2 * 2 * tile_rows * _LANE * itemsize
                   + 8 * tile_rows * _LANE * 4
                   + 2 * 3 * prows * _LANE * 4
                   + 2 * 32 * _LANE * 4
                   + (2 << 20))
    vmem_limit = int(max(vmem_budget, 16 * 1024 * 1024))

    cost = pl.CostEstimate(
        flops=3 * mel_rows * _LANE + 36 * prows * _LANE,
        transcendentals=3 * prows * _LANE,
        bytes_accessed=(mel_rows * _LANE * (mel_p.dtype.itemsize
                                            + mel_t.dtype.itemsize)
                        + 2 * 3 * prows * _LANE * 4
                        + _NUM_CORES * 32 * _LANE * 4),
    )

    partials = pl.pallas_call(
        kernel,
        out_shape=jax.ShapeDtypeStruct((_NUM_CORES, 32, _LANE), jnp.float32),
        grid_spec=pltpu.PrefetchScalarGridSpec(
            num_scalar_prefetch=0,
            grid=(_NUM_CORES, tiles_per_core),
            in_specs=[mel_spec, mel_spec, pred_spec, pred_spec],
            out_specs=out_spec,
        ),
        compiler_params=pltpu.CompilerParams(
            dimension_semantics=("parallel", "arbitrary"),
            vmem_limit_bytes=vmem_limit),
        cost_estimate=cost,
    )(mel_p, mel_t, preds, tgts)

    # Tiny wrapper reductions: sum per-core mel partials, apply the exact 1/N.
    inv_mel = 1.0 / n_mel
    inv_pred = 1.0 / n_pred
    mel_loss = partials[:, 0:8, :].sum() * inv_mel
    duration_loss = partials[0, 8:16, :].sum() * inv_pred
    pitch_loss = partials[0, 16:24, :].sum() * inv_pred
    energy_loss = partials[0, 24:32, :].sum() * inv_pred
    return mel_loss, duration_loss, pitch_loss, energy_loss


def _reference(mel_predicted, duration_predicted, pitch_predicted,
               energy_predicted, mel_target, duration, pitch, energy):
    mse = lambda a, b: jnp.mean((a - b) ** 2)
    return (
        mse(mel_predicted, mel_target),
        mse(duration_predicted, jnp.log(duration.astype(jnp.float32) + 0.5)),
        mse(pitch_predicted, jnp.log(pitch.astype(jnp.float32) + 0.5)),
        mse(energy_predicted, jnp.log(energy.astype(jnp.float32) + 0.5)),
    )


if __name__ == "__main__":
    key = jax.random.PRNGKey(0)
    B, T, M = 2, 8, 32  # batch, sequence length, n_mels

    k = jax.random.split(key, 8)
    mel_predicted = jax.random.normal(k[0], (B, T, M), dtype=jnp.float32)
    mel_target = jax.random.normal(k[1], (B, T, M), dtype=jnp.float32)
    duration_predicted = jax.random.normal(k[2], (B, T), dtype=jnp.float32)
    pitch_predicted = jax.random.normal(k[3], (B, T), dtype=jnp.float32)
    energy_predicted = jax.random.normal(k[4], (B, T), dtype=jnp.float32)
    duration = jax.random.randint(k[5], (B, T), 1, 10, dtype=jnp.int32)
    pitch = jax.random.uniform(k[6], (B, T), jnp.float32, 0.1, 5.0)
    energy = jax.random.uniform(k[7], (B, T), jnp.float32, 0.1, 5.0)

    out = tts_loss(mel_predicted, duration_predicted, pitch_predicted,
                   energy_predicted, mel_target, duration, pitch, energy)
    out = jax.block_until_ready(out)

    ref = _reference(mel_predicted, duration_predicted, pitch_predicted,
                     energy_predicted, mel_target, duration, pitch, energy)

    for got, want in zip(out, ref):
        assert jnp.allclose(got, want, rtol=1e-5, atol=1e-5), (got, want)

    print("KERNEL_OK")
</pallas_src>

<mosaic_0001>
module attributes {stable_mosaic.version = 11 : i64} {
  func.func @kernel(%arg0: i32, %arg1: i32, %arg2: memref<4x128xf32, #tpu.memory_space<vmem>>, %arg3: memref<4x128xf32, #tpu.memory_space<vmem>>, %arg4: memref<3x8x128xf32, #tpu.memory_space<vmem>>, %arg5: memref<3x8x128xf32, #tpu.memory_space<vmem>>, %arg6: memref<1x32x128xf32, #tpu.memory_space<vmem>>) attributes {dimension_semantics = [#tpu.dimension_semantics<parallel>, #tpu.dimension_semantics<arbitrary>], iteration_bounds = array<i64: 2, 1>, scalar_prefetch = 0 : i64, scratch_operands = 0 : i64, tpu.core_type = #tpu.core_type<tc>, window_params = [{transform_indices = @transform_0, window_bounds = array<i64: 4, 128>}, {transform_indices = @transform_1, window_bounds = array<i64: 4, 128>}, {pipeline_mode = #tpu.pipeline_mode<synchronous>, transform_indices = @transform_2, window_bounds = array<i64: 3, 8, 128>}, {pipeline_mode = #tpu.pipeline_mode<synchronous>, transform_indices = @transform_3, window_bounds = array<i64: 3, 8, 128>}, {transform_indices = @transform_4, window_bounds = array<i64: 1, 32, 128>}]} {
    %c0_i32 = arith.constant 0 : i32
    %0 = arith.cmpi eq, %arg1, %c0_i32 : i32
    %1 = arith.extui %0 : i1 to i32
    %c0_i32_0 = arith.constant 0 : i32
    %2 = arith.cmpi ne, %1, %c0_i32_0 : i32
    scf.if %2 {
      %cst_14 = arith.constant 0.000000e+00 : f32
      %28 = vector.broadcast %cst_14 : f32 to vector<1x32x128xf32>
      %c0_15 = arith.constant 0 : index
      %c0_16 = arith.constant 0 : index
      %c0_17 = arith.constant 0 : index
      %29 = vector.load %arg6[%c0_15, %c0_16, %c0_17] : memref<1x32x128xf32, #tpu.memory_space<vmem>>, vector<1x32x128xf32>
      tpu.vector_store %arg6[%c0_15, %c0_16, %c0_17], %28 {strides = array<i32>} : memref<1x32x128xf32, #tpu.memory_space<vmem>>, vector<1x32x128xf32>,
    } else {
    }
    %c0_i32_1 = arith.constant 0 : i32
    %3 = arith.cmpi eq, %arg1, %c0_i32_1 : i32
    %c0_i32_2 = arith.constant 0 : i32
    %4 = arith.cmpi eq, %arg0, %c0_i32_2 : i32
    %5 = arith.andi %3, %4 : i1
    %6 = arith.extui %5 : i1 to i32
    %c0_i32_3 = arith.constant 0 : i32
    %7 = arith.cmpi ne, %6, %c0_i32_3 : i32
    scf.if %7 {
      %c0_14 = arith.constant 0 : index
      %c0_15 = arith.constant 0 : index
      %c0_16 = arith.constant 0 : index
      %28 = vector.load %arg4[%c0_14, %c0_15, %c0_16] : memref<3x8x128xf32, #tpu.memory_space<vmem>>, vector<1x8x128xf32>
      %29 = vector.shape_cast %28 : vector<1x8x128xf32> to vector<8x128xf32>
      %c0_17 = arith.constant 0 : index
      %c0_18 = arith.constant 0 : index
      %c0_19 = arith.constant 0 : index
      %30 = vector.load %arg5[%c0_17, %c0_18, %c0_19] : memref<3x8x128xf32, #tpu.memory_space<vmem>>, vector<1x8x128xf32>
      %31 = vector.shape_cast %30 : vector<1x8x128xf32> to vector<8x128xf32>
      %cst_20 = arith.constant 5.000000e-01 : f32
      %32 = vector.broadcast %cst_20 : f32 to vector<8x128xf32>
      %33 = arith.addf %31, %32 : vector<8x128xf32>
      %34 = math.log %33 : vector<8x128xf32>
      %35 = arith.subf %29, %34 : vector<8x128xf32>
      %36 = arith.subf %29, %34 : vector<8x128xf32>
      %37 = arith.mulf %35, %36 : vector<8x128xf32>
      %38 = vector.shape_cast %37 : vector<8x128xf32> to vector<1x8x128xf32>
      %cst_21 = arith.constant dense<0.000000e+00> : vector<8x128xf32>
      %39 = vector.multi_reduction <add>, %38, %cst_21 [0] : vector<1x8x128xf32> to vector<8x128xf32>
      %c0_22 = arith.constant 0 : index
      %c8 = arith.constant 8 : index
      %c0_23 = arith.constant 0 : index
      %40 = vector.load %arg6[%c0_22, %c8, %c0_23] : memref<1x32x128xf32, #tpu.memory_space<vmem>>, vector<1x8x128xf32>
      %41 = vector.shape_cast %40 : vector<1x8x128xf32> to vector<8x128xf32>
      %42 = vector.shape_cast %39 : vector<8x128xf32> to vector<1x8x128xf32>
      tpu.vector_store %arg6[%c0_22, %c8, %c0_23], %42 {strides = array<i32>} : memref<1x32x128xf32, #tpu.memory_space<vmem>>, vector<1x8x128xf32>,
      %c1 = arith.constant 1 : index
      %c0_24 = arith.constant 0 : index
      %c0_25 = arith.constant 0 : index
      %43 = vector.load %arg4[%c1, %c0_24, %c0_25] : memref<3x8x128xf32, #tpu.memory_space<vmem>>, vector<1x8x128xf32>
      %44 = vector.shape_cast %43 : vector<1x8x128xf32> to vector<8x128xf32>
      %c1_26 = arith.constant 1 : index
      %c0_27 = arith.constant 0 : index
      %c0_28 = arith.constant 0 : index
      %45 = vector.load %arg5[%c1_26, %c0_27, %c0_28] : memref<3x8x128xf32, #tpu.memory_space<vmem>>, vector<1x8x128xf32>
      %46 = vector.shape_cast %45 : vector<1x8x128xf32> to vector<8x128xf32>
      %cst_29 = arith.constant 5.000000e-01 : f32
      %47 = vector.broadcast %cst_29 : f32 to vector<8x128xf32>
      %48 = arith.addf %46, %47 : vector<8x128xf32>
      %49 = math.log %48 : vector<8x128xf32>
      %50 = arith.subf %44, %49 : vector<8x128xf32>
      %51 = arith.subf %44, %49 : vector<8x128xf32>
      %52 = arith.mulf %50, %51 : vector<8x128xf32>
      %53 = vector.shape_cast %52 : vector<8x128xf32> to vector<1x8x128xf32>
      %cst_30 = arith.constant dense<0.000000e+00> : vector<8x128xf32>
      %54 = vector.multi_reduction <add>, %53, %cst_30 [0] : vector<1x8x128xf32> to vector<8x128xf32>
      %c0_31 = arith.constant 0 : index
      %c16 = arith.constant 16 : index
      %c0_32 = arith.constant 0 : index
      %55 = vector.load %arg6[%c0_31, %c16, %c0_32] : memref<1x32x128xf32, #tpu.memory_space<vmem>>, vector<1x8x128xf32>
      %56 = vector.shape_cast %55 : vector<1x8x128xf32> to vector<8x128xf32>
      %57 = vector.shape_cast %54 : vector<8x128xf32> to vector<1x8x128xf32>
      tpu.vector_store %arg6[%c0_31, %c16, %c0_32], %57 {strides = array<i32>} : memref<1x32x128xf32, #tpu.memory_space<vmem>>, vector<1x8x128xf32>,
      %c2 = arith.constant 2 : index
      %c0_33 = arith.constant 0 : index
      %c0_34 = arith.constant 0 : index
      %58 = vector.load %arg4[%c2, %c0_33, %c0_34] : memref<3x8x128xf32, #tpu.memory_space<vmem>>, vector<1x8x128xf32>
      %59 = vector.shape_cast %58 : vector<1x8x128xf32> to vector<8x128xf32>
      %c2_35 = arith.constant 2 : index
      %c0_36 = arith.constant 0 : index
      %c0_37 = arith.constant 0 : index
      %60 = vector.load %arg5[%c2_35, %c0_36, %c0_37] : memref<3x8x128xf32, #tpu.memory_space<vmem>>, vector<1x8x128xf32>
      %61 = vector.shape_cast %60 : vector<1x8x128xf32> to vector<8x128xf32>
      %cst_38 = arith.constant 5.000000e-01 : f32
      %62 = vector.broadcast %cst_38 : f32 to vector<8x128xf32>
      %63 = arith.addf %61, %62 : vector<8x128xf32>
      %64 = math.log %63 : vector<8x128xf32>
      %65 = arith.subf %59, %64 : vector<8x128xf32>
      %66 = arith.subf %59, %64 : vector<8x128xf32>
      %67 = arith.mulf %65, %66 : vector<8x128xf32>
      %68 = vector.shape_cast %67 : vector<8x128xf32> to vector<1x8x128xf32>
      %cst_39 = arith.constant dense<0.000000e+00> : vector<8x128xf32>
      %69 = vector.multi_reduction <add>, %68, %cst_39 [0] : vector<1x8x128xf32> to vector<8x128xf32>
      %c0_40 = arith.constant 0 : index
      %c24 = arith.constant 24 : index
      %c0_41 = arith.constant 0 : index
      %70 = vector.load %arg6[%c0_40, %c24, %c0_41] : memref<1x32x128xf32, #tpu.memory_space<vmem>>, vector<1x8x128xf32>
      %71 = vector.shape_cast %70 : vector<1x8x128xf32> to vector<8x128xf32>
      %72 = vector.shape_cast %69 : vector<8x128xf32> to vector<1x8x128xf32>
      tpu.vector_store %arg6[%c0_40, %c24, %c0_41], %72 {strides = array<i32>} : memref<1x32x128xf32, #tpu.memory_space<vmem>>, vector<1x8x128xf32>,
    } else {
    }
    %c1_i32 = arith.constant 1 : i32
    %8 = arith.muli %arg0, %c1_i32 : i32
    %9 = arith.addi %8, %arg1 : i32
    %c4_i32 = arith.constant 4 : i32
    %10 = arith.muli %9, %c4_i32 : i32
    %11 = tpu.iota {dimensions = array<i32: 0>} : vector<4x128xi32>
    %12 = vector.broadcast %10 : i32 to vector<4x128xi32>
    %13 = arith.addi %11, %12 : vector<4x128xi32>
    %c0 = arith.constant 0 : index
    %c0_4 = arith.constant 0 : index
    %14 = vector.load %arg2[%c0, %c0_4] : memref<4x128xf32, #tpu.memory_space<vmem>>, vector<4x128xf32>
    %c0_5 = arith.constant 0 : index
    %c0_6 = arith.constant 0 : index
    %15 = vector.load %arg3[%c0_5, %c0_6] : memref<4x128xf32, #tpu.memory_space<vmem>>, vector<4x128xf32>
    %16 = arith.subf %14, %15 : vector<4x128xf32>
    %c4_i32_7 = arith.constant 4 : i32
    %17 = vector.broadcast %c4_i32_7 : i32 to vector<4x128xi32>
    %18 = arith.cmpi slt, %13, %17 : vector<4x128xi32>
    %19 = arith.mulf %16, %16 : vector<4x128xf32>
    %cst = arith.constant 0.000000e+00 : f32
    %20 = vector.broadcast %cst : f32 to vector<4x128xf32>
    %21 = arith.select %18, %19, %20 : vector<4x128xi1>, vector<4x128xf32>
    %c0_8 = arith.constant 0 : index
    %c0_9 = arith.constant 0 : index
    %c0_10 = arith.constant 0 : index
    %22 = vector.load %arg6[%c0_8, %c0_9, %c0_10] : memref<1x32x128xf32, #tpu.memory_space<vmem>>, vector<1x4x128xf32>
    %23 = vector.shape_cast %22 : vector<1x4x128xf32> to vector<4x128xf32>
    %24 = arith.addf %23, %21 : vector<4x128xf32>
    %c0_11 = arith.constant 0 : index
    %c0_12 = arith.constant 0 : index
    %c0_13 = arith.constant 0 : index
    %25 = vector.load %arg6[%c0_11, %c0_12, %c0_13] : memref<1x32x128xf32, #tpu.memory_space<vmem>>, vector<1x4x128xf32>
    %26 = vector.shape_cast %25 : vector<1x4x128xf32> to vector<4x128xf32>
    %27 = vector.shape_cast %24 : vector<4x128xf32> to vector<1x4x128xf32>
    tpu.vector_store %arg6[%c0_11, %c0_12, %c0_13], %27 {strides = array<i32>} : memref<1x32x128xf32, #tpu.memory_space<vmem>>, vector<1x4x128xf32>,
    return
  }
  func.func @transform_0(%arg0: i32, %arg1: i32) -> (i32, i32) {
    %c1_i32 = arith.constant 1 : i32
    %0 = arith.muli %arg0, %c1_i32 : i32
    %1 = arith.addi %0, %arg1 : i32
    %c0_i32 = arith.constant 0 : i32
    %2 = arith.minsi %1, %c0_i32 : i32
    %c0_i32_0 = arith.constant 0 : i32
    %c0_i32_1 = arith.constant 0 : i32
    return %2, %c0_i32_0 : i32, i32
  }
  func.func @transform_1(%arg0: i32, %arg1: i32) -> (i32, i32) {
    %c1_i32 = arith.constant 1 : i32
    %0 = arith.muli %arg0, %c1_i32 : i32
    %1 = arith.addi %0, %arg1 : i32
    %c0_i32 = arith.constant 0 : i32
    %2 = arith.minsi %1, %c0_i32 : i32
    %c0_i32_0 = arith.constant 0 : i32
    %c0_i32_1 = arith.constant 0 : i32
    return %2, %c0_i32_0 : i32, i32
  }
  func.func @transform_2(%arg0: i32, %arg1: i32) -> (i32, i32, i32) {
    %c0_i32 = arith.constant 0 : i32
    %c0_i32_0 = arith.constant 0 : i32
    %c0_i32_1 = arith.constant 0 : i32
    %c0_i32_2 = arith.constant 0 : i32
    return %c0_i32, %c0_i32_0, %c0_i32_1 : i32, i32, i32
  }
  func.func @transform_3(%arg0: i32, %arg1: i32) -> (i32, i32, i32) {
    %c0_i32 = arith.constant 0 : i32
    %c0_i32_0 = arith.constant 0 : i32
    %c0_i32_1 = arith.constant 0 : i32
    %c0_i32_2 = arith.constant 0 : i32
    return %c0_i32, %c0_i32_0, %c0_i32_1 : i32, i32, i32
  }
  func.func @transform_4(%arg0: i32, %arg1: i32) -> (i32, i32, i32) {
    %c0_i32 = arith.constant 0 : i32
    %c0_i32_0 = arith.constant 0 : i32
    %c0_i32_1 = arith.constant 0 : i32
    return %arg0, %c0_i32, %c0_i32_0 : i32, i32, i32
  }
}

</mosaic_0001>

<llo_original>
// kernel: tts_loss.1
$region0: #{tts_loss.1}
  #allocation0 [shape = 'u32[]', space=smem, size = 0x4, offset = 0x4, fixed_abs, tag = 'smem constant byte address 0x4 - core index']
  #allocation1 [shape = 'u32[72,128]{1,0:T(1,128)}', space=vmem, size = 0x9000, scoped, tag = 'internal scratch']
  %s0 = inlined_call_operand.vmem [shape: f32[4,128], index: 0, kind: input, shape index: {}]
  %s1 = inlined_call_operand.vmem [shape: f32[4,128], index: 1, kind: input, shape index: {}]
  %s2 = inlined_call_operand.vmem [shape: f32[3,8,128], index: 2, kind: input, shape index: {}]
  %s3 = inlined_call_operand.vmem [shape: f32[3,8,128], index: 3, kind: input, shape index: {}]
  %s4 = inlined_call_operand.vmem [shape: f32[2,32,128], index: 4, kind: output, shape index: {}]
  %s5 = sld [smem:[#allocation0]]
  $region57: #{tts_loss.1} parent=0
    _
  %s7 = ssub.s32 1, %s5
  %s8 = scalar_select 0, %s7, %s5
  loop: start=0, step=1, limit=4
  $region2: #{tts_loss.1} parent=0 // loop_pre_header
    _
  $region3: #{tts_loss.1} parent=0 // loop_header
    %s10 = sphi 0, %s14
    %p11 = scmp.ge.s32.totalorder %s10, 4
    %s17 = sphi 0, %s29
    %s18 = sphi 0, %s25
    %s19 = sphi 0, %s17
    %s20 = sphi 0, %s18
    %s21 = sphi 0, %s19
    %s22 = sphi 0, %s20
    %s38 = sphi 0, %s40
    %s41 = sphi 0, %s38
    %s42 = sphi 0, %s41
    %s58 = sphi 0, %s42
    %s70 = sphi 0, %s72
    %s73 = sphi 0, %s70
    %s74 = sphi 0, %s73
    %s90 = sphi 0, %s74
    %s94 = sphi 0, %s94
    %s96 = sphi 0, %s94
    %s97 = sphi 0, %s96
    %s111 = sphi 0, %s97
    %s115 = sphi 0, %s115
    %s117 = sphi 0, %s115
    %s118 = sphi 0, %s117
    %s132 = sphi 0, %s118
    %s138 = sphi 0, %s140
    %s141 = sphi 0, %s138
    %s142 = sphi 0, %s141
    %s158 = sphi 0, %s142
  $region4: #{tts_loss.1} parent=0 // loop_header_branch
    %13 = sbr.rel (%p11) target = $region8
  $region5: #{tts_loss.1} parent=0 // loop_body
    %s15 = ssub.s32 %s10, 1
    %s16 = ssub.s32 %s10, 2
    %s23 = sadd.s32 1, %s18
    %p24 = scmp.ge.s32.totalorder %s23, 1
    %s25 = scalar_select %p24, 0, %s23
    %s26 = sadd.s32 1, %s17
    %s27 = scalar_select %p24, %s26, %s17
    %p28 = scmp.ge.s32.totalorder %s27, 2
    %s29 = scalar_select %p28, 0, %s27
    %s30 = sadd.s32 %s17, %s18
    %p31 = scmp.lt.s32.totalorder %s30, 0
    %s32 = scalar_select %p31, %s30, 0
    %s33 = sadd.s32 %s29, %s25
    %p34 = scmp.lt.s32.totalorder %s33, 0
    %s35 = scalar_select %p34, %s33, 0
    %s36 = ssub.s32 %s32, %s35
    %p37 = scmp.eq.s32.totalorder %s36, 0
    %s39 = sadd.s32 %s38, 1
    %s40 = scalar_select %p37, %s38, %s39
    %p43 = pneg %p37
    %p44 = scmp.eq.s32.totalorder %s10, 1
    %p45 = por %p43, %p44
    %p46 = scmp.ne.s32.totalorder %s38, %s41
    %p47 = scmp.eq.s32.totalorder %s10, 0
    %p48 = por %p46, %p47
    %p49 = scmp.ne.s32.totalorder %s38, %s41
    %p50 = scmp.eq.s32.totalorder %s15, 1
    %p51 = por %p49, %p50
    %p52 = scmp.ne.s32.totalorder %s41, %s42
    %p53 = scmp.eq.s32.totalorder %s15, 0
    %p54 = por %p52, %p53
    %p55 = scmp.ne.s32.totalorder %s41, %s42
    %p56 = scmp.eq.s32.totalorder %s16, 1
    %p57 = por %p55, %p56
    %p59 = scmp.ne.s32.totalorder %s42, %s58
    %p60 = scmp.eq.s32.totalorder %s16, 0
    %p61 = por %p59, %p60
    %s62 = sadd.s32 %s17, %s18
    %p63 = scmp.lt.s32.totalorder %s62, 0
    %s64 = scalar_select %p63, %s62, 0
    %s65 = sadd.s32 %s29, %s25
    %p66 = scmp.lt.s32.totalorder %s65, 0
    %s67 = scalar_select %p66, %s65, 0
    %s68 = ssub.s32 %s64, %s67
    %p69 = scmp.eq.s32.totalorder %s68, 0
    %s71 = sadd.s32 %s70, 1
    %s72 = scalar_select %p69, %s70, %s71
    %p75 = pneg %p69
    %p76 = scmp.eq.s32.totalorder %s10, 1
    %p77 = por %p75, %p76
    %p78 = scmp.ne.s32.totalorder %s70, %s73
    %p79 = scmp.eq.s32.totalorder %s10, 0
    %p80 = por %p78, %p79
    %p81 = scmp.ne.s32.totalorder %s70, %s73
    %p82 = scmp.eq.s32.totalorder %s15, 1
    %p83 = por %p81, %p82
    %p84 = scmp.ne.s32.totalorder %s73, %s74
    %p85 = scmp.eq.s32.totalorder %s15, 0
    %p86 = por %p84, %p85
    %p87 = scmp.ne.s32.totalorder %s73, %s74
    %p88 = scmp.eq.s32.totalorder %s16, 1
    %p89 = por %p87, %p88
    %p91 = scmp.ne.s32.totalorder %s74, %s90
    %p92 = scmp.eq.s32.totalorder %s16, 0
    %p93 = por %p91, %p92
    %s95 = sadd.s32 %s94, 1
    %p98 = scmp.eq.s32.totalorder %s10, 1
    %p99 = scmp.ne.s32.totalorder %s94, %s96
    %p100 = scmp.eq.s32.totalorder %s10, 0
    %p101 = por %p99, %p100
    %p102 = scmp.ne.s32.totalorder %s94, %s96
    %p103 = scmp.eq.s32.totalorder %s15, 1
    %p104 = por %p102, %p103
    %p105 = scmp.ne.s32.totalorder %s96, %s97
    %p106 = scmp.eq.s32.totalorder %s15, 0
    %p107 = por %p105, %p106
    %p108 = scmp.ne.s32.totalorder %s96, %s97
    %p109 = scmp.eq.s32.totalorder %s16, 1
    %p110 = por %p108, %p109
    %p112 = scmp.ne.s32.totalorder %s97, %s111
    %p113 = scmp.eq.s32.totalorder %s16, 0
    %p114 = por %p112, %p113
    %s116 = sadd.s32 %s115, 1
    %p119 = scmp.eq.s32.totalorder %s10, 1
    %p120 = scmp.ne.s32.totalorder %s115, %s117
    %p121 = scmp.eq.s32.totalorder %s10, 0
    %p122 = por %p120, %p121
    %p123 = scmp.ne.s32.totalorder %s115, %s117
    %p124 = scmp.eq.s32.totalorder %s15, 1
    %p125 = por %p123, %p124
    %p126 = scmp.ne.s32.totalorder %s117, %s118
    %p127 = scmp.eq.s32.totalorder %s15, 0
    %p128 = por %p126, %p127
    %p129 = scmp.ne.s32.totalorder %s117, %s118
    %p130 = scmp.eq.s32.totalorder %s16, 1
    %p131 = por %p129, %p130
    %p133 = scmp.ne.s32.totalorder %s118, %s132
    %p134 = scmp.eq.s32.totalorder %s16, 0
    %p135 = por %p133, %p134
    %s136 = ssub.s32 %s17, %s29
    %p137 = scmp.eq.s32.totalorder %s136, 0
    %s139 = sadd.s32 %s138, 1
    %s140 = scalar_select %p137, %s138, %s139
    %p143 = pneg %p137
    %p144 = scmp.eq.s32.totalorder %s10, 1
    %p145 = por %p143, %p144
    %p146 = scmp.ne.s32.totalorder %s138, %s141
    %p147 = scmp.eq.s32.totalorder %s10, 0
    %p148 = por %p146, %p147
    %p149 = scmp.ne.s32.totalorder %s138, %s141
    %p150 = scmp.eq.s32.totalorder %s15, 1
    %p151 = por %p149, %p150
    %p152 = scmp.ne.s32.totalorder %s141, %s142
    %p153 = scmp.eq.s32.totalorder %s15, 0
    %p154 = por %p152, %p153
    %p155 = scmp.ne.s32.totalorder %s141, %s142
    %p156 = scmp.eq.s32.totalorder %s16, 1
    %p157 = por %p155, %p156
    %p159 = scmp.ne.s32.totalorder %s142, %s158
    %p160 = scmp.eq.s32.totalorder %s16, 0
    %p161 = por %p159, %p160
    %p162 = scmp.le.s32.totalorder 1, %s10
    %p163 = scmp.lt.s32.totalorder %s10, 3
    %p164 = pnand %p162, %p163
    %p165 = pneg %p164
    // Predicated region
    $region9: #{tts_loss.1} parent=5 // pred_check
      _
    $region10: #{tts_loss.1} parent=5 // pred_check_branch
      %167 = sbr.rel (%p164) target = $region12
    $region11: #{tts_loss.1} parent=5 // pred_region
      %s168 = ssub.s32 %s10, 1
      // Predicated region
      $region13: #{tts_loss.1} parent=11 // pred_check
        %p169 = pneg %p107
      $region14: #{tts_loss.1} parent=11 // pred_check_branch
        %171 = sbr.rel (%p169) target = $region16
      $region15: #{tts_loss.1} parent=11 // pred_region
        _
      $region16: #{tts_loss.1} parent=11 // pred_fallthru
        _
      // Predicated region
      $region17: #{tts_loss.1} parent=11 // pred_check
        %p172 = pneg %p128
      $region18: #{tts_loss.1} parent=11 // pred_check_branch
        %174 = sbr.rel (%p172) target = $region20
      $region19: #{tts_loss.1} parent=11 // pred_region
        _
      $region20: #{tts_loss.1} parent=11 // pred_fallthru
        _
    $region12: #{tts_loss.1} parent=5 // pred_fallthru
      _
    %p175 = scmp.lt.s32.totalorder %s10, 2
    // Predicated region
    $region21: #{tts_loss.1} parent=5 // pred_check
      %p176 = pneg %p175
    $region22: #{tts_loss.1} parent=5 // pred_check_branch
      %178 = sbr.rel (%p176) target = $region24
    $region23: #{tts_loss.1} parent=5 // pred_region
      // Predicated region
      $region25: #{tts_loss.1} parent=23 // pred_check
        %p179 = pneg %p48
      $region26: #{tts_loss.1} parent=23 // pred_check_branch
        %181 = sbr.rel (%p179) target = $region28
      $region27: #{tts_loss.1} parent=23 // pred_region
        %s182 = sadd.s32 %s17, %s18
        %p183 = scmp.lt.s32.totalorder %s182, 0
        %s184 = scalar_select %p183, %s182, 0
        %p185 = scmp.lt.s32.totalorder %s184, 0
        %s186 = scalar_select %p185, %s184, 0
        %s187 = smul.addr %s186, 4
        %s188 = scalar_lea.vmem %s0, %s187
        %s189 = sadd.s32 %s17, %s18
        %p190 = scmp.lt.s32.totalorder %s189, 0
        %s191 = scalar_select %p190, %s189, 0
      $region28: #{tts_loss.1} parent=23 // pred_fallthru
        _
      // Predicated region
      $region29: #{tts_loss.1} parent=23 // pred_check
        %p192 = pneg %p80
      $region30: #{tts_loss.1} parent=23 // pred_check_branch
        %194 = sbr.rel (%p192) target = $region32
      $region31: #{tts_loss.1} parent=23 // pred_region
        %s195 = sadd.s32 %s17, %s18
        %p196 = scmp.lt.s32.totalorder %s195, 0
        %s197 = scalar_select %p196, %s195, 0
        %p198 = scmp.lt.s32.totalorder %s197, 0
        %s199 = scalar_select %p198, %s197, 0
        %s200 = smul.addr %s199, 4
        %s201 = scalar_lea.vmem %s1, %s200
        %s202 = sadd.s32 %s17, %s18
        %p203 = scmp.lt.s32.totalorder %s202, 0
        %s204 = scalar_select %p203, %s202, 0
      $region32: #{tts_loss.1} parent=23 // pred_fallthru
        _
    $region24: #{tts_loss.1} parent=5 // pred_fallthru
      _
    %p205 = scmp.le.s32.totalorder 1, %s10
    %p206 = scmp.lt.s32.totalorder %s10, 3
    %p207 = pnand %p205, %p206
    %p208 = pneg %p207
    // Predicated region
    $region33: #{tts_loss.1} parent=5 // pred_check
      _
    $region34: #{tts_loss.1} parent=5 // pred_check_branch
      %210 = sbr.rel (%p207) target = $region36
    $region35: #{tts_loss.1} parent=5 // pred_region
      %s211 = ssub.s32 %s10, 1
      %s212 = sadd.s32 %s19, %s20
      %p213 = scmp.lt.s32.totalorder %s212, 0
      %s214 = scalar_select %p213, %s212, 0
      %p215 = scmp.lt.s32.totalorder %s214, 0
      %s216 = scalar_select %p215, %s214, 0
      %s217 = smul.addr %s216, 4
      %s218 = scalar_lea.vmem %s0, %s217
      %p219 = pneg %p54
      %p220 = pneg %p51
      %s221 = sadd.s32 %s19, %s20
      %p222 = scmp.lt.s32.totalorder %s221, 0
      %s223 = scalar_select %p222, %s221, 0
      %p224 = scmp.lt.s32.totalorder %s223, 0
      %s225 = scalar_select %p224, %s223, 0
      %s226 = smul.addr %s225, 4
      %s227 = scalar_lea.vmem %s1, %s226
      %p228 = pneg %p86
      %p229 = pneg %p83
      %p230 = pneg %p107
      %p231 = pneg %p104
      %p232 = pneg %p128
      %p233 = pneg %p125
      %p234 = pneg %p154
      %p235 = pneg %p151
      %p236 = scmp.lt.s32.totalorder %s19, 1
      %s237 = scalar_select %p236, %s19, 1
      %s238 = smul.addr %s237, 4
      %s239 = smul.addr %s238, 8
      %s240 = scalar_lea.vmem %s4, %s239
      %s241 = sadd.s32 %s19, %s20
      %p242 = scmp.lt.s32.totalorder %s241, 0
      %s243 = scalar_select %p242, %s241, 0
      %p244 = scmp.lt.s32.totalorder %s243, 0
      %s245 = scalar_select %p244, %s243, 0
      %s246 = smul.addr %s245, 4
      %s247 = scalar_lea.vmem %s0, %s246
      %s248 = sadd.s32 %s19, %s20
      %p249 = scmp.lt.s32.totalorder %s248, 0
      %s250 = scalar_select %p249, %s248, 0
      %s251 = sadd.s32 %s19, %s20
      %p252 = scmp.lt.s32.totalorder %s251, 0
      %s253 = scalar_select %p252, %s251, 0
      %p254 = scmp.lt.s32.totalorder %s253, 0
      %s255 = scalar_select %p254, %s253, 0
      %s256 = smul.addr %s255, 4
      %s257 = scalar_lea.vmem %s1, %s256
      %s258 = sadd.s32 %s19, %s20
      %p259 = scmp.lt.s32.totalorder %s258, 0
      %s260 = scalar_select %p259, %s258, 0
      %p261 = scmp.lt.s32.totalorder %s19, 1
      %s262 = scalar_select %p261, %s19, 1
      %s263 = smul.addr %s262, 4
      %s264 = smul.addr %s263, 8
      %s265 = scalar_lea.vmem %s4, %s264
      %p266 = scmp.eq.s32.totalorder %s20, 0
      // Predicated region
      $region37: #{tts_loss.1} parent=35 // pred_check
        %p267 = pneg %p266
      $region38: #{tts_loss.1} parent=35 // pred_check_branch
        %269 = sbr.rel (%p267) target = $region40
      $region39: #{tts_loss.1} parent=35 // pred_region
        %270 = vst [vmem:[%s265] sm:$0xff] 0.0
        %271 = vst [vmem:[%s265 + $0x8] sm:$0xff] 0.0
        %272 = vst [vmem:[%s265 + $0x10] sm:$0xff] 0.0
        %273 = vst [vmem:[%s265 + $0x18] sm:$0xff] 0.0
      $region40: #{tts_loss.1} parent=35 // pred_fallthru
        _
      %p274 = scmp.eq.s32.totalorder %s19, 0
      %p275 = pnand %p266, %p274
      %p276 = pneg %p275
      // Predicated region
      $region41: #{tts_loss.1} parent=35 // pred_check
        _
      $region42: #{tts_loss.1} parent=35 // pred_check_branch
        %278 = sbr.rel (%p275) target = $region44
      $region43: #{tts_loss.1} parent=35 // pred_region
        %v279 = vld [vmem:[%s2] sm:$0xff]
        %v280 = vld [vmem:[%s3] sm:$0xff]
        %v281 = vadd.f32 %v280, 0.5
        %v282 = vlog2.pop %v281
        %v283 = vmul.f32 %v282, 0.6931472
        %v284 = vsub.f32 %v279, %v283
        %v285 = vmul.f32 %v284, %v284
        %v286 = vadd.f32 %v285, 0.0
        %287 = vst [vmem:[%s265 + $0x8] sm:$0xff] %v286
        %s288 = scalar_lea.vmem %s2, 8
        %v289 = vld [vmem:[%s288] sm:$0xff]
        %s290 = scalar_lea.vmem %s3, 8
        %v291 = vld [vmem:[%s290] sm:$0xff]
        %v292 = vadd.f32 %v291, 0.5
        %v293 = vlog2.pop %v292
        %v294 = vmul.f32 %v293, 0.6931472
        %v295 = vsub.f32 %v289, %v294
        %v296 = vmul.f32 %v295, %v295
        %v297 = vadd.f32 %v296, 0.0
        %298 = vst [vmem:[%s265 + $0x10] sm:$0xff] %v297
        %s299 = scalar_lea.vmem %s2, 16
        %v300 = vld [vmem:[%s299] sm:$0xff]
        %s301 = scalar_lea.vmem %s3, 16
        %v302 = vld [vmem:[%s301] sm:$0xff]
        %v303 = vadd.f32 %v302, 0.5
        %v304 = vlog2.pop %v303
        %v305 = vmul.f32 %v304, 0.6931472
        %v306 = vsub.f32 %v300, %v305
        %v307 = vmul.f32 %v306, %v306
        %v308 = vadd.f32 %v307, 0.0
        %309 = vst [vmem:[%s265 + $0x18] sm:$0xff] %v308
      $region44: #{tts_loss.1} parent=35 // pred_fallthru
        _
      %s310 = sadd.s32 %s19, %s20
      %s311 = smul.u32 %s310, 4
      %v312 = vlaneseq
      %v313 = vshrl.u32 %v312, 7
      %v314 = vstv %s311
      %v315 = vadd.s32 %v313, %v314
      %v316 = vld [vmem:[%s247] sm:$0xf]
      %v317 = vld [vmem:[%s257] sm:$0xf]
      %v318 = vsub.f32 %v316, %v317
      %vm319 = vcmp.lt.s32.totalorder %v315, 4
      %v320 = vmul.f32 %v318, %v318
      %v321 = vsel %vm319, %v320, 0.0
      %v322 = vld [vmem:[%s265] sm:$0xf]
      %v323 = vadd.f32 %v322, %v321
      %324 = vst [vmem:[%s265] sm:$0xf] %v323
      %p325 = scmp.lt.s32.totalorder %s19, 1
      %s326 = scalar_select %p325, %s19, 1
      %s327 = smul.addr %s326, 4
      %s328 = smul.addr %s327, 8
      %s329 = scalar_lea.vmem %s4, %s328
      // Predicated region
      $region45: #{tts_loss.1} parent=35 // pred_check
        %p330 = pneg %p151
      $region46: #{tts_loss.1} parent=35 // pred_check_branch
        %332 = sbr.rel (%p330) target = $region48
      $region47: #{tts_loss.1} parent=35 // pred_region
        _
      $region48: #{tts_loss.1} parent=35 // pred_fallthru
        _
    $region36: #{tts_loss.1} parent=5 // pred_fallthru
      _
    %p333 = scmp.le.s32.totalorder 2, %s10
    // Predicated region
    $region49: #{tts_loss.1} parent=5 // pred_check
      %p334 = pneg %p333
    $region50: #{tts_loss.1} parent=5 // pred_check_branch
      %336 = sbr.rel (%p334) target = $region52
    $region51: #{tts_loss.1} parent=5 // pred_region
      %s337 = ssub.s32 %s10, 2
      // Predicated region
      $region53: #{tts_loss.1} parent=51 // pred_check
        %p338 = pneg %p157
      $region54: #{tts_loss.1} parent=51 // pred_check_branch
        %340 = sbr.rel (%p338) target = $region56
      $region55: #{tts_loss.1} parent=51 // pred_region
        %p341 = scmp.lt.s32.totalorder %s21, 1
        %s342 = scalar_select %p341, %s21, 1
        %s343 = smul.addr %s342, 4
        %s344 = smul.addr %s343, 8
        %s345 = scalar_lea.vmem %s4, %s344
      $region56: #{tts_loss.1} parent=51 // pred_fallthru
        _
    $region52: #{tts_loss.1} parent=5 // pred_fallthru
      _
  $region6: #{tts_loss.1} parent=0 // loop_footer
    %s14 = sadd.s32 1, %s10
  $region7: #{tts_loss.1} parent=0 // loop_footer_branch
    %9 = sbr.rel target = $region3
  $region8: #{tts_loss.1} parent=0 // loop_exit
    _

</llo_original>
